<compile_context>
chip_gen: v7x
topology: tpu7x:2x2x1
jax: 0.10.0
libtpu: 0.0.40
codegen_flags: <defaults>
</compile_context>

<pallas_src>
import math

import jax
import jax.numpy as jnp
from jax.experimental import pallas as pl
from jax.experimental.pallas import tpu as pltpu


def _resolve_shape(batch, total_elems, shape):
    """Resolve a torch.view-style shape (possibly containing one -1)."""
    per_batch = total_elems // batch
    shape = list(shape) if shape else [-1]
    assert all(s == -1 or s > 0 for s in shape), "non-positive dims not supported"
    if -1 in shape:
        assert shape.count(-1) == 1, "only one -1 allowed in view shape"
        idx = shape.index(-1)
        known = 1
        for s in shape:
            if s != -1:
                known *= s
        assert per_batch % known == 0, "view shape incompatible with input"
        shape[idx] = per_batch // known
    assert math.prod(shape) == per_batch, "view shape incompatible with input"
    return tuple(shape)


def _dma_copy_kernel(src_hbm, dst_hbm, sem):
    # Single whole-array HBM->HBM DMA: the DMA engine streams the bytes,
    # TensorCore vector slots / vregs / VMEM are never involved.
    cp = pltpu.make_async_copy(src_hbm, dst_hbm, sem)
    cp.start()
    cp.wait()


def _pallas_dma_copy(x):
    """Identity copy of `x` via one HBM->HBM DMA (no VMEM staging, no grid)."""
    return pl.pallas_call(
        _dma_copy_kernel,
        out_shape=jax.ShapeDtypeStruct(x.shape, x.dtype),
        in_specs=[pl.BlockSpec(memory_space=pl.ANY)],
        out_specs=pl.BlockSpec(memory_space=pl.ANY),
        scratch_shapes=[pltpu.SemaphoreType.DMA],
        cost_estimate=pl.CostEstimate(
            flops=0,
            transcendentals=0,
            bytes_accessed=2 * x.size * x.dtype.itemsize,
        ),
    )(x)


def reshape_forward(x, *shape, force_copy=True):
    """Pallas equivalent of Reshape(*shape).forward(x).

    force_copy=False: pure-metadata reshape (zero cost; production path).
    force_copy=True : route the bytes through the Pallas HBM->HBM DMA kernel,
                      then apply the (free) metadata reshape to the result.
    """
    b = x.shape[0]
    out_shape = _resolve_shape(b, x.size, shape)
    if not force_copy:
        # A contiguous batch-preserving view is metadata-only; nothing to copy.
        return x.reshape((b,) + out_shape)
    out = _pallas_dma_copy(x)
    return out.reshape((b,) + out_shape)


if __name__ == "__main__":
    key = jax.random.PRNGKey(0)
    # NCHW input, small shapes
    x = jax.random.normal(key, (2, 4, 16, 16), dtype=jnp.float32)

    # Reshape(-1): (2, 4, 16, 16) -> (2, 1024), through the DMA kernel.
    y_flat = reshape_forward(x, -1)
    jax.block_until_ready(y_flat)
    assert y_flat.shape == (2, 1024)
    assert jnp.array_equal(y_flat, x.reshape(2, -1))

    # Reshape(4, 256): (2, 4, 16, 16) -> (2, 4, 256)
    y_4x256 = reshape_forward(x, 4, 256)
    jax.block_until_ready(y_4x256)
    assert y_4x256.shape == (2, 4, 256)
    assert jnp.array_equal(y_4x256, x.reshape(2, 4, 256))

    # Default Reshape() == Reshape(-1)
    y_default = reshape_forward(x)
    jax.block_until_ready(y_default)
    assert y_default.shape == (2, 1024)
    assert jnp.array_equal(y_default, x.reshape(2, -1))

    # Total not divisible by 128: the DMA path has no tiling constraints, so
    # the old masked-store fallback penalty no longer exists.
    x_odd = jax.random.normal(key, (2, 3, 5, 7), dtype=jnp.float32)
    y_odd = reshape_forward(x_odd, -1)
    jax.block_until_ready(y_odd)
    assert y_odd.shape == (2, 105)
    assert jnp.array_equal(y_odd, x_odd.reshape(2, -1))

    # bf16 input (previously a sublane-packing concern for the tiled copy).
    x_bf16 = x.astype(jnp.bfloat16)
    y_bf16 = reshape_forward(x_bf16, 4, 256)
    jax.block_until_ready(y_bf16)
    assert y_bf16.shape == (2, 4, 256)
    assert jnp.array_equal(y_bf16, x_bf16.reshape(2, 4, 256))

    # Zero-copy production path (review item #1): pure metadata, no kernel.
    y_zero = reshape_forward(x, -1, force_copy=False)
    jax.block_until_ready(y_zero)
    assert jnp.array_equal(y_zero, y_flat)

    print("KERNEL_OK")
</pallas_src>

<mosaic_0001>
module attributes {stable_mosaic.version = 11 : i64} {
  func.func @_dma_copy_kernel(%arg0: memref<2x4x16x16xf32, #tpu.memory_space<any>>, %arg1: memref<2x4x16x16xf32, #tpu.memory_space<any>>, %arg2: memref<!tpu.dma_semaphore, #tpu.memory_space<semaphore_mem>>) attributes {dimension_semantics = [], scalar_prefetch = 0 : i64, scratch_operands = 1 : i64, tpu.core_type = #tpu.core_type<tc>} {
    tpu.enqueue_dma source(%arg0 : memref<2x4x16x16xf32, #tpu.memory_space<any>>) target(%arg1 : memref<2x4x16x16xf32, #tpu.memory_space<any>>) target_semaphore(%arg2 : memref<!tpu.dma_semaphore, #tpu.memory_space<semaphore_mem>>)
    tpu.wait_dma2 semaphore(%arg2 : memref<!tpu.dma_semaphore, #tpu.memory_space<semaphore_mem>>) src(%arg0 : memref<2x4x16x16xf32, #tpu.memory_space<any>>) dst(%arg1 : memref<2x4x16x16xf32, #tpu.memory_space<any>>)
    return
  }
}

</mosaic_0001>

<llo_original>
// kernel: tpu_custom_call.1
$region0: #{tpu_custom_call.1}
  #allocation0 [shape = 'u32[]', space=smem, size = 0x4, offset = 0x4, fixed_abs, tag = 'smem constant byte address 0x4 - core index']
  #allocation1 [shape = 'u32[144,128]{1,0:T(1,128)}', space=vmem, size = 0x12000, scoped, tag = 'internal scratch']
  #allocation2 [shape = 's32[1]{0}', space=sflag, size = 0x4, scoped, tag = 'scratch operand']
  #allocation3 [shape = 's32[]', space=sflag, size = 0x4, offset = 0, fixed_abs, tag = 'sflag constant byte address 0x0 - dummy sync flag']
  #allocation4 [shape = 'u32[0]{0}', space=smem, size = 0, offset = 0, fixed_abs, tag = 'smem constant byte address 0x0 - null']
  %s0 = inlined_call_operand.hbm [shape: f32[2,4,16,16], index: 0, kind: input, shape index: {}]
  %s1 = inlined_call_operand.hbm [shape: f32[2,4,16,16], index: 1, kind: output, shape index: {}]
  %s2 = sld [smem:[#allocation0]]
  $region2: #{tpu_custom_call.1} parent=0
    _
  %s4 = ssub.s32 1, %s2
  %s5 = scalar_select 0, %s4, %s2
  %s7 = sshll.u32 1, 14
  %s8 = sxor.u32 4294967295, %s7
  %s11 = sshll.u32 3, 24
  %s12 = sxor.u32 4294967295, %s11
  %s13 = sand.u32 0, %s12
  %s15 = sor.u32 %s13, 0
  %18 = dma.general %s0, 2048, %s1, [#allocation2], [#allocation3], [#allocation4], %s15, 0
  %s19 = smul.u32 2, 4
  %s20 = smul.u32 %s19, 16
  %s21 = smul.u32 %s20, 1
  %s22 = sshll.u32 %s21, 4
  %23 = dma.done [#allocation2], %s22
  %24 = vsyncmov [#allocation2]
  %s25 = vpop.sfrf %24
  %p26 = scmp.eq.s32.totalorder %s25, 0
  %p27 = pneg %p26
  %29 = shalt.err (%p27)

</llo_original>
